<compile_context>
chip_gen: v5e
topology: v5e:2x2
jax: 0.10.0
libtpu: 0.0.40
codegen_flags: <defaults>
</compile_context>

<pallas_src>
import numpy as np
import jax
import jax.numpy as jnp
from jax.experimental import pallas as pl
from jax.experimental.pallas import tpu as pltpu


def _pe_add_kernel(x_ref, pe_ref, o_ref):
    # x_ref:  (TILE_R, TILE_F) rows of the flattened [B, T*D] input
    # pe_ref: (1, TILE_F)      matching slice of the flattened positional encoding
    # o_ref:  (TILE_R, TILE_F)
    o_ref[...] = x_ref[...] + pe_ref[...]  # (1,F) broadcasts over rows (sublanes)


def make_pos_enc(d_model: int, max_len: int = 5000) -> jnp.ndarray:
    """Deterministic buffer construction, identical to the PyTorch __init__."""
    assert d_model % 2 == 0
    t = jnp.arange(max_len, dtype=jnp.float32)                        # [max_len]
    tau = jnp.exp(jnp.arange(0, d_model, 2, dtype=jnp.float32)
                  * (-np.log(10000.0) / d_model))                     # [d_model//2]
    ang = t[:, None] * tau[None, :]                                   # [max_len, d_model//2]
    # exp(-1j * ang) -> (real, imag) = (cos(ang), -sin(ang)), interleaved on last dim
    pos_enc = jnp.stack([jnp.cos(ang), -jnp.sin(ang)], axis=-1)       # [max_len, d/2, 2]
    return pos_enc.reshape(max_len, d_model)                          # [max_len, d_model]


def _largest_aligned_divisor(n: int, align: int, cap: int) -> int:
    """Largest d with d % align == 0, n % d == 0, d <= cap; fallback: n (full extent)."""
    if n <= cap:
        return n
    d = (cap // align) * align
    while d >= align:
        if n % d == 0:
            return d
        d -= align
    return n


def positional_encoding_forward(x: jnp.ndarray, pos_enc: jnp.ndarray) -> jnp.ndarray:
    """x: [B, T, D]; pos_enc: [max_len, D]. Returns x + pos_enc[:T] (eval-mode dropout)."""
    B, T, D = x.shape
    pe = pos_enc[:T].astype(x.dtype)           # [T, D], dtype-matched to x

    # Flatten to a lane-dense 2-D problem: out[b, f] = x2[b, f] + pe2[0, f]
    F = T * D
    x2 = x.reshape(B, F)
    pe2 = pe.reshape(1, F)

    itemsize = x.dtype.itemsize
    max_tile_bytes = 2 << 20                   # ~2 MiB per buffer
    tile_f = _largest_aligned_divisor(F, 128, max(128, max_tile_bytes // itemsize))
    # Keep the whole batch per block unless it would blow the per-buffer budget.
    tile_r = B
    if B * tile_f * itemsize > max_tile_bytes:
        tile_r = _largest_aligned_divisor(
            B, 8, max(1, max_tile_bytes // (tile_f * itemsize)))

    grid = (B // tile_r, F // tile_f)

    cost = pl.CostEstimate(
        flops=B * F,
        transcendentals=0,
        bytes_accessed=(2 * B * F + F) * itemsize,
    )

    out2 = pl.pallas_call(
        _pe_add_kernel,
        out_shape=jax.ShapeDtypeStruct((B, F), x.dtype),
        grid_spec=pltpu.PrefetchScalarGridSpec(
            num_scalar_prefetch=0,
            grid=grid,
            in_specs=[
                pl.BlockSpec((tile_r, tile_f), lambda r, f: (r, f)),
                pl.BlockSpec((1, tile_f), lambda r, f: (0, f)),
            ],
            out_specs=pl.BlockSpec((tile_r, tile_f), lambda r, f: (r, f)),
        ),
        compiler_params=pltpu.CompilerParams(
            dimension_semantics=("parallel", "parallel"),
            vmem_limit_bytes=64 << 20,
        ),
        cost_estimate=cost,
    )(x2, pe2)

    return out2.reshape(B, T, D)


if __name__ == "__main__":
    B, T, D = 2, 8, 32
    max_len = 64

    key = jax.random.PRNGKey(0)
    x = jax.random.normal(key, (B, T, D), dtype=jnp.float32)

    pos_enc = make_pos_enc(D, max_len)

    out = positional_encoding_forward(x, pos_enc)
    out = jax.block_until_ready(out)

    # reference check (pure JAX)
    ref = x + pos_enc[:T][None, :, :].astype(x.dtype)
    np.testing.assert_allclose(np.asarray(out), np.asarray(ref), rtol=1e-6, atol=1e-6)

    print("KERNEL_OK")
</pallas_src>

<mosaic_0001>
module attributes {stable_mosaic.version = 11 : i64} {
  func.func @_pe_add_kernel(%arg0: i32, %arg1: i32, %arg2: memref<2x256xf32, #tpu.memory_space<vmem>>, %arg3: memref<1x256xf32, #tpu.memory_space<vmem>>, %arg4: memref<2x256xf32, #tpu.memory_space<vmem>>) attributes {dimension_semantics = [#tpu.dimension_semantics<parallel>, #tpu.dimension_semantics<parallel>], iteration_bounds = array<i64: 1, 1>, scalar_prefetch = 0 : i64, scratch_operands = 0 : i64, tpu.core_type = #tpu.core_type<tc>, window_params = [{transform_indices = @transform_0, window_bounds = array<i64: 2, 256>}, {transform_indices = @transform_1, window_bounds = array<i64: 1, 256>}, {transform_indices = @transform_2, window_bounds = array<i64: 2, 256>}]} {
    %c0 = arith.constant 0 : index
    %c0_0 = arith.constant 0 : index
    %0 = vector.load %arg2[%c0, %c0_0] : memref<2x256xf32, #tpu.memory_space<vmem>>, vector<2x256xf32>
    %c0_1 = arith.constant 0 : index
    %c0_2 = arith.constant 0 : index
    %1 = vector.load %arg3[%c0_1, %c0_2] : memref<1x256xf32, #tpu.memory_space<vmem>>, vector<1x256xf32>
    %2 = vector.broadcast %1 : vector<1x256xf32> to vector<2x256xf32>
    %3 = arith.addf %0, %2 : vector<2x256xf32>
    %c0_3 = arith.constant 0 : index
    %c0_4 = arith.constant 0 : index
    %4 = vector.load %arg4[%c0_3, %c0_4] : memref<2x256xf32, #tpu.memory_space<vmem>>, vector<2x256xf32>
    tpu.vector_store %arg4[%c0_3, %c0_4], %3 {strides = array<i32>} : memref<2x256xf32, #tpu.memory_space<vmem>>, vector<2x256xf32>,
    return
  }
  func.func @transform_0(%arg0: i32, %arg1: i32) -> (i32, i32) {
    %c0_i32 = arith.constant 0 : i32
    return %arg0, %arg1 : i32, i32
  }
  func.func @transform_1(%arg0: i32, %arg1: i32) -> (i32, i32) {
    %c0_i32 = arith.constant 0 : i32
    %c0_i32_0 = arith.constant 0 : i32
    return %c0_i32, %arg1 : i32, i32
  }
  func.func @transform_2(%arg0: i32, %arg1: i32) -> (i32, i32) {
    %c0_i32 = arith.constant 0 : i32
    return %arg0, %arg1 : i32, i32
  }
}

</mosaic_0001>

<llo_original>
// kernel: tpu_custom_call.1
$region0: #{tpu_custom_call.1}
  #allocation0 [shape = 'u32[]', space=smem, size = 0x4, offset = 0x4, fixed_abs, tag = 'smem constant byte address 0x4 - core index']
  #allocation1 [shape = 'u32[72,128]{1,0:T(1,128)}', space=vmem, size = 0x9000, scoped, tag = 'internal scratch']
  %s0 = inlined_call_operand.hbm [shape: f32[2,256], index: 0, kind: input, shape index: {}]
  %s1 = inlined_call_operand.hbm [shape: f32[1,256], index: 1, kind: input, shape index: {}]
  %s2 = inlined_call_operand.hbm [shape: f32[2,256], index: 2, kind: output, shape index: {}]
  %s3 = sld [smem:[#allocation0]]
  $region26: #{tpu_custom_call.1} parent=0
    _
  %s5 = ssub.s32 1, %s3
  %s6 = scalar_select 0, %s5, %s3
  $region1: #{tpu_custom_call.1} parent=0
    #allocation2 [shape = 'u8[2048]{0}', space=vmem, size = 0x800, scoped, tag = 'input window, operand 0, single buffered']
    #allocation3 [shape = 's32[1]{0}', space=sflag, size = 0x4, scoped, tag = 'scoped memory for tpu_custom_call.1']
    #allocation4 [shape = 's32[1]{0}', space=sflag, size = 0x4, scoped, tag = 'scoped memory for tpu_custom_call.1']
    #allocation5 [shape = 'u8[1024]{0}', space=vmem, size = 0x400, scoped, tag = 'input window, operand 1, single buffered']
    #allocation6 [shape = 's32[1]{0}', space=sflag, size = 0x4, scoped, tag = 'scoped memory for tpu_custom_call.1']
    #allocation7 [shape = 'u8[2048]{0}', space=vmem, size = 0x800, scoped, tag = 'output window, operand 0, single buffered']
    %7 = vsyncpa [#allocation3], 0
    %8 = vsyncpa [#allocation6], 0
    %9 = vsyncpa [#allocation4], 0
    // Predicated region
    $region2: #{tpu_custom_call.1} parent=1 // pred_check
      _
    $region3: #{tpu_custom_call.1} parent=1 // pred_check_branch
      %11 = sbr.rel (0) target = $region5
    $region4: #{tpu_custom_call.1} parent=1 // pred_region
      %13 = vsyncadd [#allocation3], 0
      %s15 = sshll.u32 %s0, 4
      %s16 = int_to_ptr.hbm [resolvable:$true] %s15
      %s17 = sshll.u32 [#allocation2], 4
      %s18 = int_to_ptr.vmem [resolvable:$true] %s17
      %20 = dma.hbm_to_vmem [thread:$0]  %s16, 64, %s18, [#allocation3]
    $region5: #{tpu_custom_call.1} parent=1 // pred_fallthru
      _
    // Predicated region
    $region6: #{tpu_custom_call.1} parent=1 // pred_check
      _
    $region7: #{tpu_custom_call.1} parent=1 // pred_check_branch
      %22 = sbr.rel (0) target = $region9
    $region8: #{tpu_custom_call.1} parent=1 // pred_region
      %24 = vsyncadd [#allocation6], 0
      %s26 = sshll.u32 %s1, 4
      %s27 = int_to_ptr.hbm [resolvable:$true] %s26
      %s28 = sshll.u32 [#allocation5], 4
      %s29 = int_to_ptr.vmem [resolvable:$true] %s28
      %31 = dma.hbm_to_vmem [thread:$0]  %s27, 32, %s29, [#allocation6]
    $region9: #{tpu_custom_call.1} parent=1 // pred_fallthru
      _
    // Predicated region
    $region10: #{tpu_custom_call.1} parent=1 // pred_check
      _
    $region11: #{tpu_custom_call.1} parent=1 // pred_check_branch
      %33 = sbr.rel (0) target = $region13
    $region12: #{tpu_custom_call.1} parent=1 // pred_region
      %35 = dma.done [#allocation3], 64
    $region13: #{tpu_custom_call.1} parent=1 // pred_fallthru
      _
    // Predicated region
    $region14: #{tpu_custom_call.1} parent=1 // pred_check
      _
    $region15: #{tpu_custom_call.1} parent=1 // pred_check_branch
      %37 = sbr.rel (0) target = $region17
    $region16: #{tpu_custom_call.1} parent=1 // pred_region
      %39 = dma.done [#allocation6], 32
    $region17: #{tpu_custom_call.1} parent=1 // pred_fallthru
      _
    %v40 = vld [vmem:[#allocation2] sm:$0xf]
    %v41 = vld [vmem:[#allocation5] sm:$0x3]
    %v43 = vperm.slane %v41, 0
    %v44 = vperm.slane %v41, 1
    %v45 = vrot.slane %v44, 6
    %vm46 = vcmask 1041408
    %v47 = vsel %vm46, %v43, %v45
    %v49 = vadd.f32 %v40, %v47
    %50 = vst [vmem:[#allocation7] sm:$0xf] %v49
    // Predicated region
    $region18: #{tpu_custom_call.1} parent=1 // pred_check
      _
    $region19: #{tpu_custom_call.1} parent=1 // pred_check_branch
      %52 = sbr.rel (0) target = $region21
    $region20: #{tpu_custom_call.1} parent=1 // pred_region
      %54 = vsyncadd [#allocation4], 0
      %s56 = sshll.u32 [#allocation7], 4
      %s57 = int_to_ptr.vmem [resolvable:$true] %s56
      %s58 = sshll.u32 %s2, 4
      %s59 = int_to_ptr.hbm [resolvable:$true] %s58
      %61 = dma.vmem_to_hbm [thread:$0]  %s57, 64, %s59, [#allocation4]
    $region21: #{tpu_custom_call.1} parent=1 // pred_fallthru
      _
    // Predicated region
    $region22: #{tpu_custom_call.1} parent=1 // pred_check
      _
    $region23: #{tpu_custom_call.1} parent=1 // pred_check_branch
      %63 = sbr.rel (0) target = $region25
    $region24: #{tpu_custom_call.1} parent=1 // pred_region
      %65 = dma.done [#allocation4], 64
    $region25: #{tpu_custom_call.1} parent=1 // pred_fallthru
      _
    %66 = vsyncpa [#allocation3], 1
    %67 = vsyncpa [#allocation6], 1
    %68 = vsyncpa [#allocation4], 1

</llo_original>
